<compile_context>
chip_gen: v7x
topology: tpu7x:2x2x1
jax: 0.10.0
libtpu: 0.0.40
codegen_flags: <defaults>
</compile_context>

<pallas_src>
import functools

import jax
import jax.numpy as jnp
from jax.experimental import pallas as pl
from jax.experimental.pallas import tpu as pltpu

EPS = 1e-5  # matches self.eps in the PyTorch module


def _choose_tile_n(n_tokens, vocab, itemsize):
    """Pick a token-tile size: big enough to amortize per-step overhead,
    small enough that the double-buffered pred tile fits a conservative
    VMEM budget (valid on v5e/v6e/v7x)."""
    budget = 24 << 20                               # bytes for 2x pred tile
    t = budget // max(1, 2 * vocab * itemsize)
    t = int(min(t, 1024))
    t = max(16, (t // 16) * 16)                     # bf16-safe sublane multiple
    cap = max(16, (n_tokens // 16) * 16)            # don't exceed token count
    return min(t, cap)


def _reinforce_kernel(pred_ref, action_ref, value_ref, critic_ref, out_ref,
                      pol_acc, val_acc, *, tile_n, steps_per_split, n_tokens):
    c = pl.program_id(0)          # TensorCore split (parallel)
    i = pl.program_id(1)          # token-tile step within the split (arbitrary)

    @pl.when(i == 0)
    def _init():
        pol_acc[...] = jnp.zeros_like(pol_acc)
        val_acc[...] = jnp.zeros_like(val_acc)

    p = pred_ref[...]                                       # (tile_n, V) native dtype
    act = action_ref[...]                                   # (tile_n, 1) int32
    adv = (value_ref[...].astype(jnp.float32)
           - critic_ref[...].astype(jnp.float32))           # (tile_n, 1) f32

    # Select the probability of the taken action:  sum(where(v == a, p, 0), -1)
    # (equivalent to one_hot * pred summed over vocab), then clamp the selected
    # scalar -- identical to clamping pred first, but O(tile_n) instead of
    # O(tile_n * V) clamp work.
    vocab_ids = jax.lax.broadcasted_iota(jnp.int32, p.shape, 1)
    selected = jnp.sum(jnp.where(vocab_ids == act, p, jnp.zeros_like(p)),
                       axis=-1, keepdims=True).astype(jnp.float32)
    policy_action = jnp.clip(selected, EPS, 1.0 - EPS)      # (tile_n, 1)

    # Mask rows past the true token count (padded tail tile / clamped blocks).
    row0 = (c * steps_per_split + i) * tile_n
    row_ids = row0 + jax.lax.broadcasted_iota(jnp.int32, (tile_n, 1), 0)
    valid = row_ids < n_tokens

    pol_acc[...] += jnp.where(valid, adv * jnp.log(policy_action), 0.0)
    val_acc[...] += jnp.where(valid, adv * adv, 0.0)

    @pl.when(i == pl.num_programs(1) - 1)
    def _finalize():
        # per-split partial of  sum(adv^2) - sum(adv * log(p_a))
        out_ref[...] = jnp.sum(val_acc[...] - pol_acc[...], keepdims=True)


def reinforce_loss(pred, action, value, critic_value, *, tile_n=None):
    """loss = -mean(adv * log(clamp(pred)[action])) + mean(adv^2), as in
    Reinforce.forward (forward pass only)."""
    B, S, V = pred.shape
    N = B * S

    pred2 = pred.reshape(N, V)                    # keep native dtype in HBM
    act2 = action.reshape(N, 1).astype(jnp.int32)
    val2 = value.reshape(N, 1)
    crit2 = critic_value.reshape(N, 1)

    itemsize = jnp.dtype(pred2.dtype).itemsize
    if tile_n is None:
        tile_n = _choose_tile_n(N, V, itemsize)
    num_tiles = -(-N // tile_n)
    n_split = 2 if num_tiles >= 2 else 1          # both TensorCores on v7x
    steps_per_split = -(-num_tiles // n_split)

    def row_map(c, i):
        # Clamp so redundant trailing steps re-read the last valid block; their
        # contribution is zeroed by the in-kernel row mask.
        return (jnp.minimum(c * steps_per_split + i, num_tiles - 1), 0)

    # VMEM: double-buffered pred tile dominates; size the scoped limit to it.
    vmem_needed = (2 * tile_n * V * itemsize      # pred (double-buffered)
                   + 2 * 3 * tile_n * 4           # action / value / critic
                   + 2 * tile_n * 4)              # accumulators
    vmem_limit = int(min(max(vmem_needed + (4 << 20), 16 << 20), 56 << 20))

    kernel = functools.partial(_reinforce_kernel, tile_n=tile_n,
                               steps_per_split=steps_per_split, n_tokens=N)

    partials = pl.pallas_call(
        kernel,
        out_shape=jax.ShapeDtypeStruct((n_split, 1), jnp.float32),
        grid_spec=pltpu.PrefetchScalarGridSpec(
            num_scalar_prefetch=0,
            grid=(n_split, steps_per_split),
            in_specs=[
                pl.BlockSpec((tile_n, V), row_map),
                pl.BlockSpec((tile_n, 1), row_map),
                pl.BlockSpec((tile_n, 1), row_map),
                pl.BlockSpec((tile_n, 1), row_map),
            ],
            out_specs=pl.BlockSpec((1, 1), lambda c, i: (c, 0)),
            scratch_shapes=[
                pltpu.VMEM((tile_n, 1), jnp.float32),   # sum adv * log(p_a)
                pltpu.VMEM((tile_n, 1), jnp.float32),   # sum adv^2
            ],
        ),
        compiler_params=pltpu.CompilerParams(
            dimension_semantics=("parallel", "arbitrary"),
            vmem_limit_bytes=vmem_limit),
    )(pred2, act2, val2, crit2)

    # loss = (sum(adv^2) - sum(adv*log(p_a))) / N
    return jnp.sum(partials) / jnp.float32(N)


def reinforce_loss_ref(pred, action, value, critic_value):
    """Pure-JAX reference mirroring the PyTorch forward."""
    B, S, V = pred.shape
    p = jnp.clip(pred.astype(jnp.float32), EPS, 1.0 - EPS)
    one_hot = jax.nn.one_hot(action.reshape(B, S), V, dtype=jnp.float32)
    policy_action = jnp.sum(one_hot * p, -1)                       # (B, S)
    advantage = value.astype(jnp.float32) - critic_value.astype(jnp.float32)
    policy_loss = -jnp.mean(advantage.reshape(B, S) * jnp.log(policy_action))
    value_loss = jnp.mean(advantage ** 2)
    return policy_loss + value_loss


if __name__ == "__main__":
    key = jax.random.PRNGKey(0)
    # Two small configs: one evenly tiled, one with a ragged tail that
    # exercises the in-kernel row masking and the 2-way core split.
    for (B, S, V) in [(2, 8, 32), (3, 17, 32)]:
        k1, k2, k3, k4, key = jax.random.split(key, 5)
        pred = jax.nn.softmax(jax.random.normal(k1, (B, S, V), jnp.float32), -1)
        action = jax.random.randint(k2, (B, S, 1), 0, V, jnp.int32)
        value = jax.random.normal(k3, (B, S, 1), jnp.float32)
        critic_value = jax.random.normal(k4, (B, S, 1), jnp.float32)

        loss = jax.block_until_ready(
            reinforce_loss(pred, action, value, critic_value))
        ref = jax.block_until_ready(
            reinforce_loss_ref(pred, action, value, critic_value))
        assert jnp.allclose(loss, ref, rtol=1e-5, atol=1e-5), (B, S, V, loss, ref)
    print("KERNEL_OK")
</pallas_src>

<mosaic_0001>
module attributes {stable_mosaic.version = 11 : i64} {
  func.func @_reinforce_kernel(%arg0: i32, %arg1: i32, %arg2: memref<16x32xf32, #tpu.memory_space<vmem>>, %arg3: memref<16x1xi32, #tpu.memory_space<vmem>>, %arg4: memref<16x1xf32, #tpu.memory_space<vmem>>, %arg5: memref<16x1xf32, #tpu.memory_space<vmem>>, %arg6: memref<1x1xf32, #tpu.memory_space<vmem>>, %arg7: memref<16x1xf32, #tpu.memory_space<vmem>>, %arg8: memref<16x1xf32, #tpu.memory_space<vmem>>) attributes {dimension_semantics = [#tpu.dimension_semantics<parallel>, #tpu.dimension_semantics<arbitrary>], iteration_bounds = array<i64: 1, 1>, scalar_prefetch = 0 : i64, scratch_operands = 2 : i64, tpu.core_type = #tpu.core_type<tc>, window_params = [{transform_indices = @transform_0, window_bounds = array<i64: 16, 32>}, {transform_indices = @transform_1, window_bounds = array<i64: 16, 1>}, {transform_indices = @transform_2, window_bounds = array<i64: 16, 1>}, {transform_indices = @transform_3, window_bounds = array<i64: 16, 1>}, {transform_indices = @transform_4, window_bounds = array<i64: 1, 1>}]} {
    %c0_i32 = arith.constant 0 : i32
    %0 = arith.cmpi eq, %arg1, %c0_i32 : i32
    %1 = arith.extui %0 : i1 to i32
    %c0_i32_0 = arith.constant 0 : i32
    %2 = arith.cmpi ne, %1, %c0_i32_0 : i32
    scf.if %2 {
      %cst_24 = arith.constant 0.000000e+00 : f32
      %43 = vector.broadcast %cst_24 : f32 to vector<16x1xf32>
      %c0_25 = arith.constant 0 : index
      %c0_26 = arith.constant 0 : index
      %44 = vector.load %arg7[%c0_25, %c0_26] : memref<16x1xf32, #tpu.memory_space<vmem>>, vector<16x1xf32>
      tpu.vector_store %arg7[%c0_25, %c0_26], %43 {strides = array<i32>} : memref<16x1xf32, #tpu.memory_space<vmem>>, vector<16x1xf32>,
      %cst_27 = arith.constant 0.000000e+00 : f32
      %45 = vector.broadcast %cst_27 : f32 to vector<16x1xf32>
      %c0_28 = arith.constant 0 : index
      %c0_29 = arith.constant 0 : index
      %46 = vector.load %arg8[%c0_28, %c0_29] : memref<16x1xf32, #tpu.memory_space<vmem>>, vector<16x1xf32>
      tpu.vector_store %arg8[%c0_28, %c0_29], %45 {strides = array<i32>} : memref<16x1xf32, #tpu.memory_space<vmem>>, vector<16x1xf32>,
    } else {
    }
    %c0 = arith.constant 0 : index
    %c0_1 = arith.constant 0 : index
    %3 = vector.load %arg2[%c0, %c0_1] : memref<16x32xf32, #tpu.memory_space<vmem>>, vector<16x32xf32>
    %c0_2 = arith.constant 0 : index
    %c0_3 = arith.constant 0 : index
    %4 = vector.load %arg3[%c0_2, %c0_3] : memref<16x1xi32, #tpu.memory_space<vmem>>, vector<16x1xi32>
    %c0_4 = arith.constant 0 : index
    %c0_5 = arith.constant 0 : index
    %5 = vector.load %arg4[%c0_4, %c0_5] : memref<16x1xf32, #tpu.memory_space<vmem>>, vector<16x1xf32>
    %c0_6 = arith.constant 0 : index
    %c0_7 = arith.constant 0 : index
    %6 = vector.load %arg5[%c0_6, %c0_7] : memref<16x1xf32, #tpu.memory_space<vmem>>, vector<16x1xf32>
    %7 = arith.subf %5, %6 : vector<16x1xf32>
    %8 = tpu.iota {dimensions = array<i32: 1>} : vector<16x32xi32>
    %9 = vector.broadcast %4 : vector<16x1xi32> to vector<16x32xi32>
    %10 = arith.cmpi eq, %8, %9 : vector<16x32xi32>
    %cst = arith.constant 0.000000e+00 : f32
    %11 = vector.broadcast %cst : f32 to vector<16x32xf32>
    %12 = arith.select %10, %3, %11 : vector<16x32xi1>, vector<16x32xf32>
    %cst_8 = arith.constant dense<0.000000e+00> : vector<16xf32>
    %13 = vector.multi_reduction <add>, %12, %cst_8 [1] : vector<16x32xf32> to vector<16xf32>
    %14 = vector.shape_cast %13 : vector<16xf32> to vector<16x1xf32>
    %cst_9 = arith.constant 9.99999974E-6 : f32
    %cst_10 = arith.constant 0.999989986 : f32
    %15 = vector.broadcast %cst_9 : f32 to vector<16x1xf32>
    %16 = arith.maximumf %15, %14 : vector<16x1xf32>
    %17 = vector.broadcast %cst_10 : f32 to vector<16x1xf32>
    %18 = arith.minimumf %17, %16 : vector<16x1xf32>
    %c1_i32 = arith.constant 1 : i32
    %19 = arith.muli %arg0, %c1_i32 : i32
    %20 = arith.addi %19, %arg1 : i32
    %c16_i32 = arith.constant 16 : i32
    %21 = arith.muli %20, %c16_i32 : i32
    %22 = tpu.iota {dimensions = array<i32: 0>} : vector<16x1xi32>
    %23 = vector.broadcast %21 : i32 to vector<16x1xi32>
    %24 = arith.addi %23, %22 : vector<16x1xi32>
    %c16_i32_11 = arith.constant 16 : i32
    %25 = vector.broadcast %c16_i32_11 : i32 to vector<16x1xi32>
    %26 = arith.cmpi slt, %24, %25 : vector<16x1xi32>
    %c0_12 = arith.constant 0 : index
    %c0_13 = arith.constant 0 : index
    %27 = vector.load %arg7[%c0_12, %c0_13] : memref<16x1xf32, #tpu.memory_space<vmem>>, vector<16x1xf32>
    %28 = math.log %18 : vector<16x1xf32>
    %29 = arith.mulf %7, %28 : vector<16x1xf32>
    %cst_14 = arith.constant 0.000000e+00 : f32
    %30 = vector.broadcast %cst_14 : f32 to vector<16x1xf32>
    %31 = arith.select %26, %29, %30 : vector<16x1xi1>, vector<16x1xf32>
    %32 = arith.addf %27, %31 : vector<16x1xf32>
    %c0_15 = arith.constant 0 : index
    %c0_16 = arith.constant 0 : index
    %33 = vector.load %arg7[%c0_15, %c0_16] : memref<16x1xf32, #tpu.memory_space<vmem>>, vector<16x1xf32>
    tpu.vector_store %arg7[%c0_15, %c0_16], %32 {strides = array<i32>} : memref<16x1xf32, #tpu.memory_space<vmem>>, vector<16x1xf32>,
    %c0_17 = arith.constant 0 : index
    %c0_18 = arith.constant 0 : index
    %34 = vector.load %arg8[%c0_17, %c0_18] : memref<16x1xf32, #tpu.memory_space<vmem>>, vector<16x1xf32>
    %35 = arith.mulf %7, %7 : vector<16x1xf32>
    %cst_19 = arith.constant 0.000000e+00 : f32
    %36 = vector.broadcast %cst_19 : f32 to vector<16x1xf32>
    %37 = arith.select %26, %35, %36 : vector<16x1xi1>, vector<16x1xf32>
    %38 = arith.addf %34, %37 : vector<16x1xf32>
    %c0_20 = arith.constant 0 : index
    %c0_21 = arith.constant 0 : index
    %39 = vector.load %arg8[%c0_20, %c0_21] : memref<16x1xf32, #tpu.memory_space<vmem>>, vector<16x1xf32>
    tpu.vector_store %arg8[%c0_20, %c0_21], %38 {strides = array<i32>} : memref<16x1xf32, #tpu.memory_space<vmem>>, vector<16x1xf32>,
    %c0_i32_22 = arith.constant 0 : i32
    %40 = arith.cmpi eq, %arg1, %c0_i32_22 : i32
    %41 = arith.extui %40 : i1 to i32
    %c0_i32_23 = arith.constant 0 : i32
    %42 = arith.cmpi ne, %41, %c0_i32_23 : i32
    scf.if %42 {
      %c0_24 = arith.constant 0 : index
      %c0_25 = arith.constant 0 : index
      %43 = vector.load %arg8[%c0_24, %c0_25] : memref<16x1xf32, #tpu.memory_space<vmem>>, vector<16x1xf32>
      %c0_26 = arith.constant 0 : index
      %c0_27 = arith.constant 0 : index
      %44 = vector.load %arg7[%c0_26, %c0_27] : memref<16x1xf32, #tpu.memory_space<vmem>>, vector<16x1xf32>
      %45 = arith.subf %43, %44 : vector<16x1xf32>
      %46 = vector.shape_cast %45 : vector<16x1xf32> to vector<1x16x1xf32>
      %cst_28 = arith.constant dense<0.000000e+00> : vector<1xf32>
      %47 = vector.multi_reduction <add>, %46, %cst_28 [1, 2] : vector<1x16x1xf32> to vector<1xf32>
      %48 = vector.shape_cast %47 : vector<1xf32> to vector<1x1x1xf32>
      %49 = vector.extract %48[0, 0, 0] : f32 from vector<1x1x1xf32>
      %50 = vector.broadcast %49 : f32 to vector<1x1xf32>
      %c0_29 = arith.constant 0 : index
      %c0_30 = arith.constant 0 : index
      %51 = vector.load %arg6[%c0_29, %c0_30] : memref<1x1xf32, #tpu.memory_space<vmem>>, vector<1x1xf32>
      tpu.vector_store %arg6[%c0_29, %c0_30], %50 {strides = array<i32>} : memref<1x1xf32, #tpu.memory_space<vmem>>, vector<1x1xf32>,
    } else {
    }
    return
  }
  func.func @transform_0(%arg0: i32, %arg1: i32) -> (i32, i32) {
    %c1_i32 = arith.constant 1 : i32
    %0 = arith.muli %arg0, %c1_i32 : i32
    %1 = arith.addi %0, %arg1 : i32
    %c0_i32 = arith.constant 0 : i32
    %2 = arith.minsi %1, %c0_i32 : i32
    %c0_i32_0 = arith.constant 0 : i32
    %c0_i32_1 = arith.constant 0 : i32
    return %2, %c0_i32_0 : i32, i32
  }
  func.func @transform_1(%arg0: i32, %arg1: i32) -> (i32, i32) {
    %c1_i32 = arith.constant 1 : i32
    %0 = arith.muli %arg0, %c1_i32 : i32
    %1 = arith.addi %0, %arg1 : i32
    %c0_i32 = arith.constant 0 : i32
    %2 = arith.minsi %1, %c0_i32 : i32
    %c0_i32_0 = arith.constant 0 : i32
    %c0_i32_1 = arith.constant 0 : i32
    return %2, %c0_i32_0 : i32, i32
  }
  func.func @transform_2(%arg0: i32, %arg1: i32) -> (i32, i32) {
    %c1_i32 = arith.constant 1 : i32
    %0 = arith.muli %arg0, %c1_i32 : i32
    %1 = arith.addi %0, %arg1 : i32
    %c0_i32 = arith.constant 0 : i32
    %2 = arith.minsi %1, %c0_i32 : i32
    %c0_i32_0 = arith.constant 0 : i32
    %c0_i32_1 = arith.constant 0 : i32
    return %2, %c0_i32_0 : i32, i32
  }
  func.func @transform_3(%arg0: i32, %arg1: i32) -> (i32, i32) {
    %c1_i32 = arith.constant 1 : i32
    %0 = arith.muli %arg0, %c1_i32 : i32
    %1 = arith.addi %0, %arg1 : i32
    %c0_i32 = arith.constant 0 : i32
    %2 = arith.minsi %1, %c0_i32 : i32
    %c0_i32_0 = arith.constant 0 : i32
    %c0_i32_1 = arith.constant 0 : i32
    return %2, %c0_i32_0 : i32, i32
  }
  func.func @transform_4(%arg0: i32, %arg1: i32) -> (i32, i32) {
    %c0_i32 = arith.constant 0 : i32
    %c0_i32_0 = arith.constant 0 : i32
    return %arg0, %c0_i32 : i32, i32
  }
}

</mosaic_0001>

<llo_original>
// kernel: tpu_custom_call.1
$region0: #{tpu_custom_call.1}
  #allocation0 [shape = 'u32[]', space=smem, size = 0x4, offset = 0x4, fixed_abs, tag = 'smem constant byte address 0x4 - core index']
  #allocation1 [shape = 'u32[144,128]{1,0:T(1,128)}', space=vmem, size = 0x12000, scoped, tag = 'internal scratch']
  #allocation2 [shape = 'f32[16,1]{1,0:T(8,128)}', space=vmem, size = 0x2000, scoped, tag = 'scratch operand']
  #allocation3 [shape = 'f32[16,1]{1,0:T(8,128)}', space=vmem, size = 0x2000, scoped, tag = 'scratch operand']
  %s0 = inlined_call_operand.vmem [shape: f32[16,32], index: 0, kind: input, shape index: {}]
  %s1 = inlined_call_operand.vmem [shape: s32[16,1], index: 1, kind: input, shape index: {}]
  %s2 = inlined_call_operand.vmem [shape: f32[16,1], index: 2, kind: input, shape index: {}]
  %s3 = inlined_call_operand.vmem [shape: f32[16,1], index: 3, kind: input, shape index: {}]
  %s4 = inlined_call_operand.hbm [shape: f32[1,1], index: 4, kind: output, shape index: {}]
  %s5 = sld [smem:[#allocation0]]
  $region34: #{tpu_custom_call.1} parent=0
    _
  %s7 = ssub.s32 1, %s5
  %s8 = scalar_select 0, %s7, %s5
  $region1: #{tpu_custom_call.1} parent=0
    #allocation4 [shape = 'u8[512]{0}', space=vmem, size = 0x400, scoped, tag = 'output window, operand 0, single buffered']
    #allocation5 [shape = 's32[1]{0}', space=sflag, size = 0x4, scoped, tag = 'scoped memory for tpu_custom_call.1']
    %9 = vsyncpa [#allocation5], 0
    // Predicated region
    $region2: #{tpu_custom_call.1} parent=1 // pred_check
      _
    $region3: #{tpu_custom_call.1} parent=1 // pred_check_branch
      %11 = sbr.rel (0) target = $region5
    $region4: #{tpu_custom_call.1} parent=1 // pred_region
      %s12 = sadd.s32 0, 0
      %p13 = scmp.lt.s32.totalorder %s12, 0
      %s14 = scalar_select %p13, %s12, 0
      %s15 = smul.u32 2, %s14
      %p16 = scmp.lt.s32.totalorder %s15, 1
      %s17 = scalar_select %p16, %s15, 1
      %s18 = smul.addr %s17, 8
      %s19 = scalar_lea.vmem %s0, %s18
      %s20 = sadd.s32 0, 0
      %p21 = scmp.lt.s32.totalorder %s20, 0
      %s22 = scalar_select %p21, %s20, 0
      %s23 = smul.u32 2, %s22
    $region5: #{tpu_custom_call.1} parent=1 // pred_fallthru
      _
    // Predicated region
    $region6: #{tpu_custom_call.1} parent=1 // pred_check
      _
    $region7: #{tpu_custom_call.1} parent=1 // pred_check_branch
      %25 = sbr.rel (0) target = $region9
    $region8: #{tpu_custom_call.1} parent=1 // pred_region
      %s26 = sadd.s32 0, 0
      %p27 = scmp.lt.s32.totalorder %s26, 0
      %s28 = scalar_select %p27, %s26, 0
      %s29 = smul.u32 2, %s28
      %p30 = scmp.lt.s32.totalorder %s29, 1
      %s31 = scalar_select %p30, %s29, 1
      %s32 = smul.addr %s31, 8
      %s33 = scalar_lea.vmem %s1, %s32
      %s34 = sadd.s32 0, 0
      %p35 = scmp.lt.s32.totalorder %s34, 0
      %s36 = scalar_select %p35, %s34, 0
      %s37 = smul.u32 2, %s36
    $region9: #{tpu_custom_call.1} parent=1 // pred_fallthru
      _
    // Predicated region
    $region10: #{tpu_custom_call.1} parent=1 // pred_check
      _
    $region11: #{tpu_custom_call.1} parent=1 // pred_check_branch
      %39 = sbr.rel (0) target = $region13
    $region12: #{tpu_custom_call.1} parent=1 // pred_region
      %s40 = sadd.s32 0, 0
      %p41 = scmp.lt.s32.totalorder %s40, 0
      %s42 = scalar_select %p41, %s40, 0
      %s43 = smul.u32 2, %s42
      %p44 = scmp.lt.s32.totalorder %s43, 1
      %s45 = scalar_select %p44, %s43, 1
      %s46 = smul.addr %s45, 8
      %s47 = scalar_lea.vmem %s2, %s46
      %s48 = sadd.s32 0, 0
      %p49 = scmp.lt.s32.totalorder %s48, 0
      %s50 = scalar_select %p49, %s48, 0
      %s51 = smul.u32 2, %s50
    $region13: #{tpu_custom_call.1} parent=1 // pred_fallthru
      _
    // Predicated region
    $region14: #{tpu_custom_call.1} parent=1 // pred_check
      _
    $region15: #{tpu_custom_call.1} parent=1 // pred_check_branch
      %53 = sbr.rel (0) target = $region17
    $region16: #{tpu_custom_call.1} parent=1 // pred_region
      %s54 = sadd.s32 0, 0
      %p55 = scmp.lt.s32.totalorder %s54, 0
      %s56 = scalar_select %p55, %s54, 0
      %s57 = smul.u32 2, %s56
      %p58 = scmp.lt.s32.totalorder %s57, 1
      %s59 = scalar_select %p58, %s57, 1
      %s60 = smul.addr %s59, 8
      %s61 = scalar_lea.vmem %s3, %s60
      %s62 = sadd.s32 0, 0
      %p63 = scmp.lt.s32.totalorder %s62, 0
      %s64 = scalar_select %p63, %s62, 0
      %s65 = smul.u32 2, %s64
    $region17: #{tpu_custom_call.1} parent=1 // pred_fallthru
      _
    %s66 = sadd.s32 0, 0
    %p67 = scmp.lt.s32.totalorder %s66, 0
    %s68 = scalar_select %p67, %s66, 0
    %s69 = smul.u32 2, %s68
    %p70 = scmp.lt.s32.totalorder %s69, 1
    %s71 = scalar_select %p70, %s69, 1
    %s72 = smul.addr %s71, 8
    %s73 = scalar_lea.vmem %s0, %s72
    %s74 = sadd.s32 0, 0
    %p75 = scmp.lt.s32.totalorder %s74, 0
    %s76 = scalar_select %p75, %s74, 0
    %s77 = smul.u32 2, %s76
    %p78 = scmp.lt.s32.totalorder %s77, 1
    %s79 = scalar_select %p78, %s77, 1
    %s80 = smul.addr %s79, 8
    %s81 = scalar_lea.vmem %s1, %s80
    %s82 = sadd.s32 0, 0
    %p83 = scmp.lt.s32.totalorder %s82, 0
    %s84 = scalar_select %p83, %s82, 0
    %s85 = smul.u32 2, %s84
    %p86 = scmp.lt.s32.totalorder %s85, 1
    %s87 = scalar_select %p86, %s85, 1
    %s88 = smul.addr %s87, 8
    %s89 = scalar_lea.vmem %s2, %s88
    %s90 = sadd.s32 0, 0
    %p91 = scmp.lt.s32.totalorder %s90, 0
    %s92 = scalar_select %p91, %s90, 0
    %s93 = smul.u32 2, %s92
    %p94 = scmp.lt.s32.totalorder %s93, 1
    %s95 = scalar_select %p94, %s93, 1
    %s96 = smul.addr %s95, 8
    %s97 = scalar_lea.vmem %s3, %s96
    %s98 = sadd.s32 0, 0
    %p99 = scmp.lt.s32.totalorder %s98, 0
    %s100 = scalar_select %p99, %s98, 0
    %s101 = smul.u32 2, %s100
    %p102 = scmp.lt.s32.totalorder %s101, 1
    %s103 = scalar_select %p102, %s101, 1
    %s104 = smul.addr %s103, 8
    %s105 = scalar_lea.vmem %s0, %s104
    %s106 = sadd.s32 0, 0
    %p107 = scmp.lt.s32.totalorder %s106, 0
    %s108 = scalar_select %p107, %s106, 0
    %s109 = smul.u32 2, %s108
    %s110 = sadd.s32 0, 0
    %p111 = scmp.lt.s32.totalorder %s110, 0
    %s112 = scalar_select %p111, %s110, 0
    %s113 = smul.u32 2, %s112
    %p114 = scmp.lt.s32.totalorder %s113, 1
    %s115 = scalar_select %p114, %s113, 1
    %s116 = smul.addr %s115, 8
    %s117 = scalar_lea.vmem %s1, %s116
    %s118 = sadd.s32 0, 0
    %p119 = scmp.lt.s32.totalorder %s118, 0
    %s120 = scalar_select %p119, %s118, 0
    %s121 = smul.u32 2, %s120
    %s122 = sadd.s32 0, 0
    %p123 = scmp.lt.s32.totalorder %s122, 0
    %s124 = scalar_select %p123, %s122, 0
    %s125 = smul.u32 2, %s124
    %p126 = scmp.lt.s32.totalorder %s125, 1
    %s127 = scalar_select %p126, %s125, 1
    %s128 = smul.addr %s127, 8
    %s129 = scalar_lea.vmem %s2, %s128
    %s130 = sadd.s32 0, 0
    %p131 = scmp.lt.s32.totalorder %s130, 0
    %s132 = scalar_select %p131, %s130, 0
    %s133 = smul.u32 2, %s132
    %s134 = sadd.s32 0, 0
    %p135 = scmp.lt.s32.totalorder %s134, 0
    %s136 = scalar_select %p135, %s134, 0
    %s137 = smul.u32 2, %s136
    %p138 = scmp.lt.s32.totalorder %s137, 1
    %s139 = scalar_select %p138, %s137, 1
    %s140 = smul.addr %s139, 8
    %s141 = scalar_lea.vmem %s3, %s140
    %s142 = sadd.s32 0, 0
    %p143 = scmp.lt.s32.totalorder %s142, 0
    %s144 = scalar_select %p143, %s142, 0
    %s145 = smul.u32 2, %s144
    %p146 = scmp.eq.s32.totalorder 0, 0
    // Predicated region
    $region18: #{tpu_custom_call.1} parent=1 // pred_check
      %p147 = pneg %p146
    $region19: #{tpu_custom_call.1} parent=1 // pred_check_branch
      %149 = sbr.rel (%p147) target = $region21
    $region20: #{tpu_custom_call.1} parent=1 // pred_region
      %vm150 = vcmask 7168
      %151 = vst.msk [vmem:[#allocation2] sm:$0xff] %vm150, 0.0
      %152 = vst.msk [vmem:[#allocation2 + $0x8] sm:$0xff] %vm150, 0.0
      %153 = vst.msk [vmem:[#allocation3] sm:$0xff] %vm150, 0.0
      %154 = vst.msk [vmem:[#allocation3 + $0x8] sm:$0xff] %vm150, 0.0
    $region21: #{tpu_custom_call.1} parent=1 // pred_fallthru
      _
    %v155 = vld [vmem:[%s105] sm:$0xff]
    %v156 = vld [vmem:[%s105 + $0x8] sm:$0xff]
    %v157 = vld [vmem:[%s117] sm:$0xff]
    %v158 = vld [vmem:[%s117 + $0x8] sm:$0xff]
    %v159 = vld [vmem:[%s129] sm:$0xff]
    %v160 = vld [vmem:[%s129 + $0x8] sm:$0xff]
    %v161 = vld [vmem:[%s141] sm:$0xff]
    %v162 = vld [vmem:[%s141 + $0x8] sm:$0xff]
    %v163 = vsub.f32 %v159, %v161
    %v164 = vsub.f32 %v160, %v162
    %v165 = vlaneseq
    %v166 = vand.u32 %v165, 127
    %167 = vset.pattern.permute.xlu0 0
    %168 = vperm.xlu0 %167, %v157
    %v169 = vpop.permute.xlu0 %168
    %170 = vset.pattern.permute.xlu0 0
    %171 = vperm.xlu0 %170, %v158
    %v172 = vpop.permute.xlu0 %171
    %vm173 = vcmp.eq.s32.totalorder %v166, %v169
    %vm174 = vcmp.eq.s32.totalorder %v166, %v172
    %v175 = vsel %vm173, %v155, 0.0
    %v176 = vsel %vm174, %v156, 0.0
    %vm177 = vcmask 261120
    %v178 = vsel %vm177, %v175, 0.0
    %179 = vadd.xlane.f32.xlu0 %v178
    %v180 = vpop.xlane.xlu0 %179
    %v181 = vsel %vm177, %v176, 0.0
    %182 = vadd.xlane.f32.xlu0 %v181
    %v183 = vpop.xlane.xlu0 %182
    %v184 = vmax.f32 %v180, 1e-05
    %v185 = vmax.f32 %v183, 1e-05
    %v186 = vmin.f32 %v184, 0.99999
    %v187 = vmin.f32 %v185, 0.99999
    %s188 = sadd.s32 0, 0
    %s189 = smul.u32 %s188, 16
    %v190 = vlaneseq
    %v191 = vshrl.u32 %v190, 7
    %v192 = vadd.s32 %v191, 8
    %v193 = vstv %s189
    %v194 = vadd.s32 %v193, %v191
    %v195 = vadd.s32 %v193, %v192
    %vm196 = vcmp.lt.s32.totalorder %v194, 16
    %vm197 = vcmp.lt.s32.totalorder %v195, 16
    %v198 = vld [vmem:[#allocation2] sm:$0xff]
    %v199 = vld [vmem:[#allocation2 + $0x8] sm:$0xff]
    %v200 = vlog2.pop %v186
    %v201 = vmul.f32 %v200, 0.6931472
    %v202 = vlog2.pop %v187
    %v203 = vmul.f32 %v202, 0.6931472
    %v204 = vmul.f32 %v163, %v201
    %v205 = vmul.f32 %v164, %v203
    %v206 = vsel %vm196, %v204, 0.0
    %v207 = vsel %vm197, %v205, 0.0
    %v208 = vadd.f32 %v198, %v206
    %v209 = vadd.f32 %v199, %v207
    %vm210 = vcmask 7168
    %211 = vst.msk [vmem:[#allocation2] sm:$0xff] %vm210, %v208
    %212 = vst.msk [vmem:[#allocation2 + $0x8] sm:$0xff] %vm210, %v209
    %v213 = vld [vmem:[#allocation3] sm:$0xff]
    %v214 = vld [vmem:[#allocation3 + $0x8] sm:$0xff]
    %v215 = vmul.f32 %v163, %v163
    %v216 = vmul.f32 %v164, %v164
    %v217 = vsel %vm196, %v215, 0.0
    %v218 = vsel %vm197, %v216, 0.0
    %v219 = vadd.f32 %v213, %v217
    %v220 = vadd.f32 %v214, %v218
    %221 = vst.msk [vmem:[#allocation3] sm:$0xff] %vm210, %v219
    %222 = vst.msk [vmem:[#allocation3 + $0x8] sm:$0xff] %vm210, %v220
    // Predicated region
    $region22: #{tpu_custom_call.1} parent=1 // pred_check
      %p223 = pneg %p146
    $region23: #{tpu_custom_call.1} parent=1 // pred_check_branch
      %225 = sbr.rel (%p223) target = $region25
    $region24: #{tpu_custom_call.1} parent=1 // pred_region
      %v226 = vld [vmem:[#allocation3] sm:$0xff]
      %v227 = vld [vmem:[#allocation3 + $0x8] sm:$0xff]
      %v228 = vld [vmem:[#allocation2] sm:$0xff]
      %v229 = vld [vmem:[#allocation2 + $0x8] sm:$0xff]
      %v230 = vsub.f32 %v226, %v228
      %v231 = vsub.f32 %v227, %v229
      %v232 = vsel %vm210, %v230, 0.0
      %v233 = vsel %vm210, %v231, 0.0
      %v234 = vadd.f32 %v232, %v233
      %235 = vadd.xlane.f32.xlu0 %v234
      %v236 = vpop.xlane.xlu0 %235
      %v237 = vrot.slane %v236, 4
      %v238 = vadd.f32 %v236, %v237
      %v239 = vrot.slane %v238, 2
      %v240 = vadd.f32 %v238, %v239
      %v241 = vrot.slane %v240, 1
      %v242 = vadd.f32 %v240, %v241
      %s243 = vtos %v242
      %v244 = vstv %s243
      %vm245 = vcmask 0
      %246 = vst.msk [vmem:[#allocation4] sm:$0x1] %vm245, %v244
    $region25: #{tpu_custom_call.1} parent=1 // pred_fallthru
      _
    // Predicated region
    $region26: #{tpu_custom_call.1} parent=1 // pred_check
      _
    $region27: #{tpu_custom_call.1} parent=1 // pred_check_branch
      %248 = sbr.rel (0) target = $region29
    $region28: #{tpu_custom_call.1} parent=1 // pred_region
      %s250 = ssub.s32 16, 16
      %251 = vsyncadd [#allocation5], %s250
      %s253 = sshll.u32 [#allocation4], 4
      %s254 = int_to_ptr.vmem [resolvable:$true] %s253
      %256 = dma.vmem_to_hbm [thread:$0]  %s254, 16, %s4, [#allocation5]
    $region29: #{tpu_custom_call.1} parent=1 // pred_fallthru
      _
    // Predicated region
    $region30: #{tpu_custom_call.1} parent=1 // pred_check
      _
    $region31: #{tpu_custom_call.1} parent=1 // pred_check_branch
      %258 = sbr.rel (0) target = $region33
    $region32: #{tpu_custom_call.1} parent=1 // pred_region
      %259 = dma.done [#allocation5], 16
    $region33: #{tpu_custom_call.1} parent=1 // pred_fallthru
      _
    %260 = vsyncpa [#allocation5], 1

</llo_original>
